<compile_context>
chip_gen: v7x
topology: tpu7x:2x2x1
jax: 0.10.0
libtpu: 0.0.40
codegen_flags: <defaults>
</compile_context>

<pallas_src>
import functools

import jax
import jax.numpy as jnp
from jax.experimental import pallas as pl
from jax.experimental.pallas import tpu as pltpu

PATCH = 4  # patch_size in the reference module


def _patchify_kernel(x_ref, o_ref, *, p, nw, c):
    # x_ref: (1, TH, p, w*c)     TH patch-rows; each patch-row = p image rows,
    #                            every image row lane-dense (w*c wide).
    # o_ref: (1, TH, nw*p*p*c)   TH patch-rows; all nw patches of a patch-row
    #                            flattened contiguously (lane-dense output).
    pc = p * c          # one patch row (j, ch)      -> contiguous in both views
    ppc = p * pc        # one whole patch (i, j, ch) -> contiguous in the output
    for i in range(p):                    # p == 4, static & fully unrolled
        for wj in range(nw):              # static unroll over patches in a row
            dst0 = wj * ppc + i * pc
            o_ref[0, :, dst0:dst0 + pc] = x_ref[0, :, i, wj * pc:(wj + 1) * pc]


def _pick_tile_rows(nh, patch_row_bytes, budget_bytes):
    """Patch-rows per grid step: biggest tile under budget, 8-aligned or full."""
    cap = max(1, budget_bytes // max(1, patch_row_bytes))
    if nh <= cap:
        return nh                         # block dim == full dim: always legal
    th = (min(cap, nh) // 8) * 8          # keep out-block second-minor 8-aligned
    return th if th >= 8 else nh


def patchify(x, *, row_tile_budget_bytes=1 << 20):
    """x: (bs, h, w, c) -> (bs, (h//p)*(w//p), p, p, c). Exact Unfold semantics."""
    bs, h, w, c = x.shape
    p = PATCH
    assert h % p == 0 and w % p == 0, "h and w must be multiples of patch_size"
    nh, nw = h // p, w // p
    itemsize = jnp.dtype(x.dtype).itemsize

    patch_row_bytes = p * w * c * itemsize
    th = _pick_tile_rows(nh, patch_row_bytes, row_tile_budget_bytes)
    grid = (bs, pl.cdiv(nh, th))

    # Free reshape: splits h -> (nh, p) and merges trailing (w, c) -> w*c.
    x_rows = x.reshape(bs, nh, p, w * c)

    kernel = functools.partial(_patchify_kernel, p=p, nw=nw, c=c)

    out_flat = pl.pallas_call(
        kernel,
        out_shape=jax.ShapeDtypeStruct((bs, nh, nw * p * p * c), x.dtype),
        grid=grid,
        in_specs=[
            pl.BlockSpec((1, th, p, w * c), lambda b, r: (b, r, 0, 0)),
        ],
        out_specs=pl.BlockSpec((1, th, nw * p * p * c), lambda b, r: (b, r, 0)),
        compiler_params=pltpu.CompilerParams(
            dimension_semantics=("parallel", "parallel"),
            vmem_limit_bytes=32 * 1024 * 1024,
        ),
        cost_estimate=pl.CostEstimate(
            flops=0,
            transcendentals=0,
            bytes_accessed=2 * x.size * itemsize,
        ),
    )(x_rows)

    # Free metadata reshape back to the PyTorch output layout (bs, L, p, p, c):
    # (p, p, c) are the trailing contiguous dims of every patch.
    return out_flat.reshape(bs, nh * nw, p, p, c)


def patchify_ref(x):
    # Pure-JAX reference replicating the PyTorch permute/unfold/view/permute.
    bs, h, w, c = x.shape
    p = PATCH
    nh, nw = h // p, w // p
    y = x.reshape(bs, nh, p, nw, p, c)
    y = jnp.transpose(y, (0, 1, 3, 2, 4, 5))  # (bs, nh, nw, p, p, c)
    return y.reshape(bs, nh * nw, p, p, c)


if __name__ == "__main__":
    key = jax.random.PRNGKey(0)
    bs, h, w, c = 2, 16, 16, 4
    x = jax.random.normal(key, (bs, h, w, c), dtype=jnp.float32)

    out = jax.block_until_ready(patchify(x))

    ref = patchify_ref(x)
    assert out.shape == (bs, (h // PATCH) * (w // PATCH), PATCH, PATCH, c), out.shape
    assert jnp.array_equal(out, ref), "Pallas patchify mismatch vs reference"

    print("KERNEL_OK")
</pallas_src>

<mosaic_0001>
module attributes {stable_mosaic.version = 11 : i64} {
  func.func @_patchify_kernel(%arg0: i32, %arg1: i32, %arg2: memref<1x4x4x64xf32, #tpu.memory_space<vmem>>, %arg3: memref<1x4x256xf32, #tpu.memory_space<vmem>>) attributes {dimension_semantics = [#tpu.dimension_semantics<parallel>, #tpu.dimension_semantics<parallel>], iteration_bounds = array<i64: 2, 1>, scalar_prefetch = 0 : i64, scratch_operands = 0 : i64, tpu.core_type = #tpu.core_type<tc>, window_params = [{transform_indices = @transform_0, window_bounds = array<i64: 1, 4, 4, 64>}, {transform_indices = @transform_1, window_bounds = array<i64: 1, 4, 256>}]} {
    %c0 = arith.constant 0 : index
    %c0_0 = arith.constant 0 : index
    %c0_1 = arith.constant 0 : index
    %c0_2 = arith.constant 0 : index
    %0 = vector.load %arg2[%c0, %c0_0, %c0_1, %c0_2] : memref<1x4x4x64xf32, #tpu.memory_space<vmem>>, vector<1x4x1x16xf32>
    %1 = vector.shape_cast %0 : vector<1x4x1x16xf32> to vector<4x16xf32>
    %c0_3 = arith.constant 0 : index
    %c0_4 = arith.constant 0 : index
    %c0_5 = arith.constant 0 : index
    %2 = vector.load %arg3[%c0_3, %c0_4, %c0_5] : memref<1x4x256xf32, #tpu.memory_space<vmem>>, vector<1x4x16xf32>
    %3 = vector.shape_cast %2 : vector<1x4x16xf32> to vector<4x16xf32>
    %4 = vector.shape_cast %1 : vector<4x16xf32> to vector<1x4x16xf32>
    tpu.vector_store %arg3[%c0_3, %c0_4, %c0_5], %4 {strides = array<i32>} : memref<1x4x256xf32, #tpu.memory_space<vmem>>, vector<1x4x16xf32>,
    %c0_6 = arith.constant 0 : index
    %c0_7 = arith.constant 0 : index
    %c0_8 = arith.constant 0 : index
    %c16 = arith.constant 16 : index
    %5 = vector.load %arg2[%c0_6, %c0_7, %c0_8, %c16] : memref<1x4x4x64xf32, #tpu.memory_space<vmem>>, vector<1x4x1x16xf32>
    %6 = vector.shape_cast %5 : vector<1x4x1x16xf32> to vector<4x16xf32>
    %c0_9 = arith.constant 0 : index
    %c0_10 = arith.constant 0 : index
    %c64 = arith.constant 64 : index
    %7 = vector.load %arg3[%c0_9, %c0_10, %c64] : memref<1x4x256xf32, #tpu.memory_space<vmem>>, vector<1x4x16xf32>
    %8 = vector.shape_cast %7 : vector<1x4x16xf32> to vector<4x16xf32>
    %9 = vector.shape_cast %6 : vector<4x16xf32> to vector<1x4x16xf32>
    tpu.vector_store %arg3[%c0_9, %c0_10, %c64], %9 {strides = array<i32>} : memref<1x4x256xf32, #tpu.memory_space<vmem>>, vector<1x4x16xf32>,
    %c0_11 = arith.constant 0 : index
    %c0_12 = arith.constant 0 : index
    %c0_13 = arith.constant 0 : index
    %c32 = arith.constant 32 : index
    %10 = vector.load %arg2[%c0_11, %c0_12, %c0_13, %c32] : memref<1x4x4x64xf32, #tpu.memory_space<vmem>>, vector<1x4x1x16xf32>
    %11 = vector.shape_cast %10 : vector<1x4x1x16xf32> to vector<4x16xf32>
    %c0_14 = arith.constant 0 : index
    %c0_15 = arith.constant 0 : index
    %c128 = arith.constant 128 : index
    %12 = vector.load %arg3[%c0_14, %c0_15, %c128] : memref<1x4x256xf32, #tpu.memory_space<vmem>>, vector<1x4x16xf32>
    %13 = vector.shape_cast %12 : vector<1x4x16xf32> to vector<4x16xf32>
    %14 = vector.shape_cast %11 : vector<4x16xf32> to vector<1x4x16xf32>
    tpu.vector_store %arg3[%c0_14, %c0_15, %c128], %14 {strides = array<i32>} : memref<1x4x256xf32, #tpu.memory_space<vmem>>, vector<1x4x16xf32>,
    %c0_16 = arith.constant 0 : index
    %c0_17 = arith.constant 0 : index
    %c0_18 = arith.constant 0 : index
    %c48 = arith.constant 48 : index
    %15 = vector.load %arg2[%c0_16, %c0_17, %c0_18, %c48] : memref<1x4x4x64xf32, #tpu.memory_space<vmem>>, vector<1x4x1x16xf32>
    %16 = vector.shape_cast %15 : vector<1x4x1x16xf32> to vector<4x16xf32>
    %c0_19 = arith.constant 0 : index
    %c0_20 = arith.constant 0 : index
    %c192 = arith.constant 192 : index
    %17 = vector.load %arg3[%c0_19, %c0_20, %c192] : memref<1x4x256xf32, #tpu.memory_space<vmem>>, vector<1x4x16xf32>
    %18 = vector.shape_cast %17 : vector<1x4x16xf32> to vector<4x16xf32>
    %19 = vector.shape_cast %16 : vector<4x16xf32> to vector<1x4x16xf32>
    tpu.vector_store %arg3[%c0_19, %c0_20, %c192], %19 {strides = array<i32>} : memref<1x4x256xf32, #tpu.memory_space<vmem>>, vector<1x4x16xf32>,
    %c0_21 = arith.constant 0 : index
    %c0_22 = arith.constant 0 : index
    %c1 = arith.constant 1 : index
    %c0_23 = arith.constant 0 : index
    %20 = vector.load %arg2[%c0_21, %c0_22, %c1, %c0_23] : memref<1x4x4x64xf32, #tpu.memory_space<vmem>>, vector<1x4x1x16xf32>
    %21 = vector.shape_cast %20 : vector<1x4x1x16xf32> to vector<4x16xf32>
    %c0_24 = arith.constant 0 : index
    %c0_25 = arith.constant 0 : index
    %c16_26 = arith.constant 16 : index
    %22 = vector.load %arg3[%c0_24, %c0_25, %c16_26] : memref<1x4x256xf32, #tpu.memory_space<vmem>>, vector<1x4x16xf32>
    %23 = vector.shape_cast %22 : vector<1x4x16xf32> to vector<4x16xf32>
    %24 = vector.shape_cast %21 : vector<4x16xf32> to vector<1x4x16xf32>
    tpu.vector_store %arg3[%c0_24, %c0_25, %c16_26], %24 {strides = array<i32>} : memref<1x4x256xf32, #tpu.memory_space<vmem>>, vector<1x4x16xf32>,
    %c0_27 = arith.constant 0 : index
    %c0_28 = arith.constant 0 : index
    %c1_29 = arith.constant 1 : index
    %c16_30 = arith.constant 16 : index
    %25 = vector.load %arg2[%c0_27, %c0_28, %c1_29, %c16_30] : memref<1x4x4x64xf32, #tpu.memory_space<vmem>>, vector<1x4x1x16xf32>
    %26 = vector.shape_cast %25 : vector<1x4x1x16xf32> to vector<4x16xf32>
    %c0_31 = arith.constant 0 : index
    %c0_32 = arith.constant 0 : index
    %c80 = arith.constant 80 : index
    %27 = vector.load %arg3[%c0_31, %c0_32, %c80] : memref<1x4x256xf32, #tpu.memory_space<vmem>>, vector<1x4x16xf32>
    %28 = vector.shape_cast %27 : vector<1x4x16xf32> to vector<4x16xf32>
    %29 = vector.shape_cast %26 : vector<4x16xf32> to vector<1x4x16xf32>
    tpu.vector_store %arg3[%c0_31, %c0_32, %c80], %29 {strides = array<i32>} : memref<1x4x256xf32, #tpu.memory_space<vmem>>, vector<1x4x16xf32>,
    %c0_33 = arith.constant 0 : index
    %c0_34 = arith.constant 0 : index
    %c1_35 = arith.constant 1 : index
    %c32_36 = arith.constant 32 : index
    %30 = vector.load %arg2[%c0_33, %c0_34, %c1_35, %c32_36] : memref<1x4x4x64xf32, #tpu.memory_space<vmem>>, vector<1x4x1x16xf32>
    %31 = vector.shape_cast %30 : vector<1x4x1x16xf32> to vector<4x16xf32>
    %c0_37 = arith.constant 0 : index
    %c0_38 = arith.constant 0 : index
    %c144 = arith.constant 144 : index
    %32 = vector.load %arg3[%c0_37, %c0_38, %c144] : memref<1x4x256xf32, #tpu.memory_space<vmem>>, vector<1x4x16xf32>
    %33 = vector.shape_cast %32 : vector<1x4x16xf32> to vector<4x16xf32>
    %34 = vector.shape_cast %31 : vector<4x16xf32> to vector<1x4x16xf32>
    tpu.vector_store %arg3[%c0_37, %c0_38, %c144], %34 {strides = array<i32>} : memref<1x4x256xf32, #tpu.memory_space<vmem>>, vector<1x4x16xf32>,
    %c0_39 = arith.constant 0 : index
    %c0_40 = arith.constant 0 : index
    %c1_41 = arith.constant 1 : index
    %c48_42 = arith.constant 48 : index
    %35 = vector.load %arg2[%c0_39, %c0_40, %c1_41, %c48_42] : memref<1x4x4x64xf32, #tpu.memory_space<vmem>>, vector<1x4x1x16xf32>
    %36 = vector.shape_cast %35 : vector<1x4x1x16xf32> to vector<4x16xf32>
    %c0_43 = arith.constant 0 : index
    %c0_44 = arith.constant 0 : index
    %c208 = arith.constant 208 : index
    %37 = vector.load %arg3[%c0_43, %c0_44, %c208] : memref<1x4x256xf32, #tpu.memory_space<vmem>>, vector<1x4x16xf32>
    %38 = vector.shape_cast %37 : vector<1x4x16xf32> to vector<4x16xf32>
    %39 = vector.shape_cast %36 : vector<4x16xf32> to vector<1x4x16xf32>
    tpu.vector_store %arg3[%c0_43, %c0_44, %c208], %39 {strides = array<i32>} : memref<1x4x256xf32, #tpu.memory_space<vmem>>, vector<1x4x16xf32>,
    %c0_45 = arith.constant 0 : index
    %c0_46 = arith.constant 0 : index
    %c2 = arith.constant 2 : index
    %c0_47 = arith.constant 0 : index
    %40 = vector.load %arg2[%c0_45, %c0_46, %c2, %c0_47] : memref<1x4x4x64xf32, #tpu.memory_space<vmem>>, vector<1x4x1x16xf32>
    %41 = vector.shape_cast %40 : vector<1x4x1x16xf32> to vector<4x16xf32>
    %c0_48 = arith.constant 0 : index
    %c0_49 = arith.constant 0 : index
    %c32_50 = arith.constant 32 : index
    %42 = vector.load %arg3[%c0_48, %c0_49, %c32_50] : memref<1x4x256xf32, #tpu.memory_space<vmem>>, vector<1x4x16xf32>
    %43 = vector.shape_cast %42 : vector<1x4x16xf32> to vector<4x16xf32>
    %44 = vector.shape_cast %41 : vector<4x16xf32> to vector<1x4x16xf32>
    tpu.vector_store %arg3[%c0_48, %c0_49, %c32_50], %44 {strides = array<i32>} : memref<1x4x256xf32, #tpu.memory_space<vmem>>, vector<1x4x16xf32>,
    %c0_51 = arith.constant 0 : index
    %c0_52 = arith.constant 0 : index
    %c2_53 = arith.constant 2 : index
    %c16_54 = arith.constant 16 : index
    %45 = vector.load %arg2[%c0_51, %c0_52, %c2_53, %c16_54] : memref<1x4x4x64xf32, #tpu.memory_space<vmem>>, vector<1x4x1x16xf32>
    %46 = vector.shape_cast %45 : vector<1x4x1x16xf32> to vector<4x16xf32>
    %c0_55 = arith.constant 0 : index
    %c0_56 = arith.constant 0 : index
    %c96 = arith.constant 96 : index
    %47 = vector.load %arg3[%c0_55, %c0_56, %c96] : memref<1x4x256xf32, #tpu.memory_space<vmem>>, vector<1x4x16xf32>
    %48 = vector.shape_cast %47 : vector<1x4x16xf32> to vector<4x16xf32>
    %49 = vector.shape_cast %46 : vector<4x16xf32> to vector<1x4x16xf32>
    tpu.vector_store %arg3[%c0_55, %c0_56, %c96], %49 {strides = array<i32>} : memref<1x4x256xf32, #tpu.memory_space<vmem>>, vector<1x4x16xf32>,
    %c0_57 = arith.constant 0 : index
    %c0_58 = arith.constant 0 : index
    %c2_59 = arith.constant 2 : index
    %c32_60 = arith.constant 32 : index
    %50 = vector.load %arg2[%c0_57, %c0_58, %c2_59, %c32_60] : memref<1x4x4x64xf32, #tpu.memory_space<vmem>>, vector<1x4x1x16xf32>
    %51 = vector.shape_cast %50 : vector<1x4x1x16xf32> to vector<4x16xf32>
    %c0_61 = arith.constant 0 : index
    %c0_62 = arith.constant 0 : index
    %c160 = arith.constant 160 : index
    %52 = vector.load %arg3[%c0_61, %c0_62, %c160] : memref<1x4x256xf32, #tpu.memory_space<vmem>>, vector<1x4x16xf32>
    %53 = vector.shape_cast %52 : vector<1x4x16xf32> to vector<4x16xf32>
    %54 = vector.shape_cast %51 : vector<4x16xf32> to vector<1x4x16xf32>
    tpu.vector_store %arg3[%c0_61, %c0_62, %c160], %54 {strides = array<i32>} : memref<1x4x256xf32, #tpu.memory_space<vmem>>, vector<1x4x16xf32>,
    %c0_63 = arith.constant 0 : index
    %c0_64 = arith.constant 0 : index
    %c2_65 = arith.constant 2 : index
    %c48_66 = arith.constant 48 : index
    %55 = vector.load %arg2[%c0_63, %c0_64, %c2_65, %c48_66] : memref<1x4x4x64xf32, #tpu.memory_space<vmem>>, vector<1x4x1x16xf32>
    %56 = vector.shape_cast %55 : vector<1x4x1x16xf32> to vector<4x16xf32>
    %c0_67 = arith.constant 0 : index
    %c0_68 = arith.constant 0 : index
    %c224 = arith.constant 224 : index
    %57 = vector.load %arg3[%c0_67, %c0_68, %c224] : memref<1x4x256xf32, #tpu.memory_space<vmem>>, vector<1x4x16xf32>
    %58 = vector.shape_cast %57 : vector<1x4x16xf32> to vector<4x16xf32>
    %59 = vector.shape_cast %56 : vector<4x16xf32> to vector<1x4x16xf32>
    tpu.vector_store %arg3[%c0_67, %c0_68, %c224], %59 {strides = array<i32>} : memref<1x4x256xf32, #tpu.memory_space<vmem>>, vector<1x4x16xf32>,
    %c0_69 = arith.constant 0 : index
    %c0_70 = arith.constant 0 : index
    %c3 = arith.constant 3 : index
    %c0_71 = arith.constant 0 : index
    %60 = vector.load %arg2[%c0_69, %c0_70, %c3, %c0_71] : memref<1x4x4x64xf32, #tpu.memory_space<vmem>>, vector<1x4x1x16xf32>
    %61 = vector.shape_cast %60 : vector<1x4x1x16xf32> to vector<4x16xf32>
    %c0_72 = arith.constant 0 : index
    %c0_73 = arith.constant 0 : index
    %c48_74 = arith.constant 48 : index
    %62 = vector.load %arg3[%c0_72, %c0_73, %c48_74] : memref<1x4x256xf32, #tpu.memory_space<vmem>>, vector<1x4x16xf32>
    %63 = vector.shape_cast %62 : vector<1x4x16xf32> to vector<4x16xf32>
    %64 = vector.shape_cast %61 : vector<4x16xf32> to vector<1x4x16xf32>
    tpu.vector_store %arg3[%c0_72, %c0_73, %c48_74], %64 {strides = array<i32>} : memref<1x4x256xf32, #tpu.memory_space<vmem>>, vector<1x4x16xf32>,
    %c0_75 = arith.constant 0 : index
    %c0_76 = arith.constant 0 : index
    %c3_77 = arith.constant 3 : index
    %c16_78 = arith.constant 16 : index
    %65 = vector.load %arg2[%c0_75, %c0_76, %c3_77, %c16_78] : memref<1x4x4x64xf32, #tpu.memory_space<vmem>>, vector<1x4x1x16xf32>
    %66 = vector.shape_cast %65 : vector<1x4x1x16xf32> to vector<4x16xf32>
    %c0_79 = arith.constant 0 : index
    %c0_80 = arith.constant 0 : index
    %c112 = arith.constant 112 : index
    %67 = vector.load %arg3[%c0_79, %c0_80, %c112] : memref<1x4x256xf32, #tpu.memory_space<vmem>>, vector<1x4x16xf32>
    %68 = vector.shape_cast %67 : vector<1x4x16xf32> to vector<4x16xf32>
    %69 = vector.shape_cast %66 : vector<4x16xf32> to vector<1x4x16xf32>
    tpu.vector_store %arg3[%c0_79, %c0_80, %c112], %69 {strides = array<i32>} : memref<1x4x256xf32, #tpu.memory_space<vmem>>, vector<1x4x16xf32>,
    %c0_81 = arith.constant 0 : index
    %c0_82 = arith.constant 0 : index
    %c3_83 = arith.constant 3 : index
    %c32_84 = arith.constant 32 : index
    %70 = vector.load %arg2[%c0_81, %c0_82, %c3_83, %c32_84] : memref<1x4x4x64xf32, #tpu.memory_space<vmem>>, vector<1x4x1x16xf32>
    %71 = vector.shape_cast %70 : vector<1x4x1x16xf32> to vector<4x16xf32>
    %c0_85 = arith.constant 0 : index
    %c0_86 = arith.constant 0 : index
    %c176 = arith.constant 176 : index
    %72 = vector.load %arg3[%c0_85, %c0_86, %c176] : memref<1x4x256xf32, #tpu.memory_space<vmem>>, vector<1x4x16xf32>
    %73 = vector.shape_cast %72 : vector<1x4x16xf32> to vector<4x16xf32>
    %74 = vector.shape_cast %71 : vector<4x16xf32> to vector<1x4x16xf32>
    tpu.vector_store %arg3[%c0_85, %c0_86, %c176], %74 {strides = array<i32>} : memref<1x4x256xf32, #tpu.memory_space<vmem>>, vector<1x4x16xf32>,
    %c0_87 = arith.constant 0 : index
    %c0_88 = arith.constant 0 : index
    %c3_89 = arith.constant 3 : index
    %c48_90 = arith.constant 48 : index
    %75 = vector.load %arg2[%c0_87, %c0_88, %c3_89, %c48_90] : memref<1x4x4x64xf32, #tpu.memory_space<vmem>>, vector<1x4x1x16xf32>
    %76 = vector.shape_cast %75 : vector<1x4x1x16xf32> to vector<4x16xf32>
    %c0_91 = arith.constant 0 : index
    %c0_92 = arith.constant 0 : index
    %c240 = arith.constant 240 : index
    %77 = vector.load %arg3[%c0_91, %c0_92, %c240] : memref<1x4x256xf32, #tpu.memory_space<vmem>>, vector<1x4x16xf32>
    %78 = vector.shape_cast %77 : vector<1x4x16xf32> to vector<4x16xf32>
    %79 = vector.shape_cast %76 : vector<4x16xf32> to vector<1x4x16xf32>
    tpu.vector_store %arg3[%c0_91, %c0_92, %c240], %79 {strides = array<i32>} : memref<1x4x256xf32, #tpu.memory_space<vmem>>, vector<1x4x16xf32>,
    return
  }
  func.func @transform_0(%arg0: i32, %arg1: i32) -> (i32, i32, i32, i32) {
    %c0_i32 = arith.constant 0 : i32
    %c0_i32_0 = arith.constant 0 : i32
    %c0_i32_1 = arith.constant 0 : i32
    return %arg0, %arg1, %c0_i32, %c0_i32_0 : i32, i32, i32, i32
  }
  func.func @transform_1(%arg0: i32, %arg1: i32) -> (i32, i32, i32) {
    %c0_i32 = arith.constant 0 : i32
    %c0_i32_0 = arith.constant 0 : i32
    return %arg0, %arg1, %c0_i32 : i32, i32, i32
  }
}

</mosaic_0001>

<llo_original>
// kernel: tpu_custom_call.1
$region0: #{tpu_custom_call.1}
  #allocation0 [shape = 'u32[]', space=smem, size = 0x4, offset = 0x4, fixed_abs, tag = 'smem constant byte address 0x4 - core index']
  #allocation1 [shape = 'u32[144,128]{1,0:T(1,128)}', space=vmem, size = 0x12000, scoped, tag = 'internal scratch']
  %s0 = inlined_call_operand.hbm [shape: f32[2,4,4,64], index: 0, kind: input, shape index: {}]
  %s1 = inlined_call_operand.hbm [shape: f32[2,4,256], index: 1, kind: output, shape index: {}]
  %s2 = sld [smem:[#allocation0]]
  $region41: #{tpu_custom_call.1} parent=0
    _
  %s4 = ssub.s32 1, %s2
  %s5 = scalar_select 0, %s4, %s2
  $region1: #{tpu_custom_call.1} parent=0
    #allocation2 [shape = 'u8[16384]{0}', space=vmem, size = 0x4000, scoped, tag = 'input window, operand 0']
    #allocation3 [shape = 's32[2]{0}', space=sflag, size = 0x8, scoped, tag = 'scoped memory for tpu_custom_call.1']
    #allocation4 [shape = 's32[2]{0}', space=sflag, size = 0x8, scoped, tag = 'scoped memory for tpu_custom_call.1']
    #allocation5 [shape = 'u8[8192]{0}', space=vmem, size = 0x2000, scoped, tag = 'output window, operand 0']
    %6 = vsyncpa [#allocation3], 0
    %s7 = scalar_lea.sflag [#allocation3], 1
    %8 = vsyncpa %s7, 0
    %9 = vsyncpa [#allocation4], 0
    %s10 = scalar_lea.sflag [#allocation4], 1
    %11 = vsyncpa %s10, 0
    loop: start=0, step=1, limit=4
    $region2: #{tpu_custom_call.1} parent=1 // loop_pre_header
      _
    $region3: #{tpu_custom_call.1} parent=1 // loop_header
      %s13 = sphi 0, %s17
      %p14 = scmp.ge.s32.totalorder %s13, 4
      %s20 = sphi 0, %s32
      %s21 = sphi 0, %s28
      %s22 = sphi 0, %s20
      %s23 = sphi 0, %s21
      %s24 = sphi 0, %s22
      %s25 = sphi 0, %s23
      %s37 = sphi 0, %s39
      %s40 = sphi 0, %s37
      %s41 = sphi 0, %s40
      %s57 = sphi 0, %s41
      %s65 = sphi 0, %s67
      %s68 = sphi 0, %s65
      %s69 = sphi 0, %s68
      %s85 = sphi 0, %s69
    $region4: #{tpu_custom_call.1} parent=1 // loop_header_branch
      %16 = sbr.rel (%p14) target = $region8
    $region5: #{tpu_custom_call.1} parent=1 // loop_body
      %s18 = ssub.s32 %s13, 1
      %s19 = ssub.s32 %s13, 2
      %s26 = sadd.s32 1, %s21
      %p27 = scmp.ge.s32.totalorder %s26, 1
      %s28 = scalar_select %p27, 0, %s26
      %s29 = sadd.s32 1, %s20
      %s30 = scalar_select %p27, %s29, %s20
      %p31 = scmp.ge.s32.totalorder %s30, 2
      %s32 = scalar_select %p31, 0, %s30
      %s33 = ssub.s32 %s20, %s32
      %s34 = ssub.s32 %s21, %s28
      %s35 = sor.u32 %s33, %s34
      %p36 = scmp.eq.s32.totalorder %s35, 0
      %s38 = sadd.s32 %s37, 1
      %s39 = scalar_select %p36, %s37, %s38
      %p42 = pneg %p36
      %p43 = scmp.eq.s32.totalorder %s13, 1
      %p44 = por %p42, %p43
      %p45 = scmp.ne.s32.totalorder %s37, %s40
      %p46 = scmp.eq.s32.totalorder %s13, 0
      %p47 = por %p45, %p46
      %p48 = scmp.ne.s32.totalorder %s37, %s40
      %p49 = scmp.eq.s32.totalorder %s18, 1
      %p50 = por %p48, %p49
      %p51 = scmp.ne.s32.totalorder %s40, %s41
      %p52 = scmp.eq.s32.totalorder %s18, 0
      %p53 = por %p51, %p52
      %p54 = scmp.ne.s32.totalorder %s40, %s41
      %p55 = scmp.eq.s32.totalorder %s19, 1
      %p56 = por %p54, %p55
      %p58 = scmp.ne.s32.totalorder %s41, %s57
      %p59 = scmp.eq.s32.totalorder %s19, 0
      %p60 = por %p58, %p59
      %s61 = ssub.s32 %s20, %s32
      %s62 = ssub.s32 %s21, %s28
      %s63 = sor.u32 %s61, %s62
      %p64 = scmp.eq.s32.totalorder %s63, 0
      %s66 = sadd.s32 %s65, 1
      %s67 = scalar_select %p64, %s65, %s66
      %p70 = pneg %p64
      %p71 = scmp.eq.s32.totalorder %s13, 1
      %p72 = por %p70, %p71
      %p73 = scmp.ne.s32.totalorder %s65, %s68
      %p74 = scmp.eq.s32.totalorder %s13, 0
      %p75 = por %p73, %p74
      %p76 = scmp.ne.s32.totalorder %s65, %s68
      %p77 = scmp.eq.s32.totalorder %s18, 1
      %p78 = por %p76, %p77
      %p79 = scmp.ne.s32.totalorder %s68, %s69
      %p80 = scmp.eq.s32.totalorder %s18, 0
      %p81 = por %p79, %p80
      %p82 = scmp.ne.s32.totalorder %s68, %s69
      %p83 = scmp.eq.s32.totalorder %s19, 1
      %p84 = por %p82, %p83
      %p86 = scmp.ne.s32.totalorder %s69, %s85
      %p87 = scmp.eq.s32.totalorder %s19, 0
      %p88 = por %p86, %p87
      %p89 = scmp.le.s32.totalorder 1, %s13
      %p90 = scmp.lt.s32.totalorder %s13, 3
      %p91 = pnand %p89, %p90
      %p92 = pneg %p91
      // Predicated region
      $region9: #{tpu_custom_call.1} parent=5 // pred_check
        _
      $region10: #{tpu_custom_call.1} parent=5 // pred_check_branch
        %94 = sbr.rel (%p91) target = $region12
      $region11: #{tpu_custom_call.1} parent=5 // pred_region
        %s95 = ssub.s32 %s13, 1
      $region12: #{tpu_custom_call.1} parent=5 // pred_fallthru
        _
      %p96 = scmp.lt.s32.totalorder %s13, 2
      // Predicated region
      $region13: #{tpu_custom_call.1} parent=5 // pred_check
        %p97 = pneg %p96
      $region14: #{tpu_custom_call.1} parent=5 // pred_check_branch
        %99 = sbr.rel (%p97) target = $region16
      $region15: #{tpu_custom_call.1} parent=5 // pred_region
        // Predicated region
        $region17: #{tpu_custom_call.1} parent=15 // pred_check
          %p100 = pneg %p47
        $region18: #{tpu_custom_call.1} parent=15 // pred_check_branch
          %102 = sbr.rel (%p100) target = $region20
        $region19: #{tpu_custom_call.1} parent=15 // pred_region
          %s103 = sand.u32 %s37, 1
          %s104 = scalar_lea.sflag [#allocation3], %s103
          %s105 = sand.u32 %s37, 1
          %s106 = smul.addr %s105, 16
          %s107 = scalar_lea.vmem [#allocation2], %s106
          %s108 = smul.u32 4, %s21
          %s110 = ssub.s32 256, 256
          %111 = vsyncadd %s104, %s110
          %s112 = smul.addr %s20, 4
          %s113 = sadd.s32 %s108, %s112
          %s114 = smul.addr %s113, 64
          %s115 = scalar_lea.hbm %s0, %s114
          %s116 = sshll.u32 %s107, 4
          %s117 = int_to_ptr.vmem [resolvable:$true] %s116
          %122 = dma.hbm_to_vmem [thread:$0]  %s115, 256, %s117, %s104, 64, 64, 4
        $region20: #{tpu_custom_call.1} parent=15 // pred_fallthru
          _
      $region16: #{tpu_custom_call.1} parent=5 // pred_fallthru
        _
      %p123 = scmp.le.s32.totalorder 1, %s13
      %p124 = scmp.lt.s32.totalorder %s13, 3
      %p125 = pnand %p123, %p124
      %p126 = pneg %p125
      // Predicated region
      $region21: #{tpu_custom_call.1} parent=5 // pred_check
        _
      $region22: #{tpu_custom_call.1} parent=5 // pred_check_branch
        %128 = sbr.rel (%p125) target = $region24
      $region23: #{tpu_custom_call.1} parent=5 // pred_region
        %s129 = ssub.s32 %s13, 1
        %s130 = sand.u32 %s40, 1
        %s131 = scalar_lea.sflag [#allocation3], %s130
        %s132 = sand.u32 %s40, 1
        %s133 = smul.addr %s132, 16
        %s134 = scalar_lea.vmem [#allocation2], %s133
        // Predicated region
        $region25: #{tpu_custom_call.1} parent=23 // pred_check
          %p135 = pneg %p53
        $region26: #{tpu_custom_call.1} parent=23 // pred_check_branch
          %137 = sbr.rel (%p135) target = $region28
        $region27: #{tpu_custom_call.1} parent=23 // pred_region
          %138 = dma.done %s131, 256
        $region28: #{tpu_custom_call.1} parent=23 // pred_fallthru
          _
        %s139 = sand.u32 %s40, 1
        %s140 = scalar_lea.sflag [#allocation3], %s139
        %s141 = sand.u32 %s40, 1
        %s142 = smul.addr %s141, 16
        %s143 = scalar_lea.vmem [#allocation2], %s142
        %p144 = pneg %p53
        %p145 = pneg %p50
        %p146 = pneg %p81
        %p147 = pneg %p78
        %s148 = sand.u32 %s68, 1
        %s149 = scalar_lea.sflag [#allocation4], %s148
        %s150 = sand.u32 %s68, 1
        %s151 = smul.addr %s150, 8
        %s152 = scalar_lea.vmem [#allocation5], %s151
        %s153 = smul.u32 4, %s23
        %v154 = vld [vmem:[%s134] sm:$0x1]
        %v155 = vld [vmem:[%s134 + $0x4] sm:$0x1]
        %v156 = vld [vmem:[%s134 + $0x8] sm:$0x1]
        %v157 = vld [vmem:[%s134 + $0xc] sm:$0x1]
        %v162 = vrot.slane %v155, 7
        %vm163 = vcmask 1041409
        %v164 = vsel %vm163, %v162, %v154
        %vm165 = vcmask 1045509
        %v166 = vsel %vm165, %v162, %v164
        %v167 = vrot.slane %v156, 6
        %vm168 = vcmask 1042434
        %v169 = vsel %vm168, %v167, %v166
        %vm170 = vcmask 1046534
        %v171 = vsel %vm170, %v167, %v169
        %v172 = vrot.slane %v157, 5
        %vm173 = vcmask 1043459
        %v174 = vsel %vm173, %v172, %v171
        %vm175 = vcmask 1047559
        %v176 = vsel %vm175, %v172, %v174
        %vm178 = vcmask 125952
        %179 = vst.msk [vmem:[%s152] sm:$0xf] %vm178, %v176
        %v180 = vld [vmem:[%s134] sm:$0x1]
        %v181 = vld [vmem:[%s134 + $0x4] sm:$0x1]
        %v182 = vld [vmem:[%s134 + $0x8] sm:$0x1]
        %v183 = vld [vmem:[%s134 + $0xc] sm:$0x1]
        %v188 = vrot.slane %v181, 7
        %v189 = vsel %vm163, %v188, %v180
        %v190 = vsel %vm165, %v188, %v189
        %v191 = vrot.slane %v182, 6
        %v192 = vsel %vm168, %v191, %v190
        %v193 = vsel %vm170, %v191, %v192
        %v194 = vrot.slane %v183, 5
        %v195 = vsel %vm173, %v194, %v193
        %v196 = vsel %vm175, %v194, %v195
        %197 = vrot.lane.b32.xlu0 %v196, 48
        %v198 = vpop.permute.xlu0 %197
        %vm200 = vcmask 650752
        %201 = vst.msk [vmem:[%s152] sm:$0xf] %vm200, %v198
        %v202 = vld [vmem:[%s134] sm:$0x1]
        %v203 = vld [vmem:[%s134 + $0x4] sm:$0x1]
        %v204 = vld [vmem:[%s134 + $0x8] sm:$0x1]
        %v205 = vld [vmem:[%s134 + $0xc] sm:$0x1]
        %v210 = vrot.slane %v203, 7
        %v211 = vsel %vm163, %v210, %v202
        %v212 = vsel %vm165, %v210, %v211
        %v213 = vrot.slane %v204, 6
        %v214 = vsel %vm168, %v213, %v212
        %v215 = vsel %vm170, %v213, %v214
        %v216 = vrot.slane %v205, 5
        %v217 = vsel %vm173, %v216, %v215
        %v218 = vsel %vm175, %v216, %v217
        %219 = vrot.lane.b32.xlu0 %v218, 96
        %v220 = vpop.permute.xlu0 %219
        %222 = vst.msk [vmem:[%s152 + $0x4] sm:$0xf] %vm178, %v220
        %v223 = vld [vmem:[%s134] sm:$0x1]
        %v224 = vld [vmem:[%s134 + $0x4] sm:$0x1]
        %v225 = vld [vmem:[%s134 + $0x8] sm:$0x1]
        %v226 = vld [vmem:[%s134 + $0xc] sm:$0x1]
        %v231 = vrot.slane %v224, 7
        %v232 = vsel %vm163, %v231, %v223
        %v233 = vsel %vm165, %v231, %v232
        %v234 = vrot.slane %v225, 6
        %v235 = vsel %vm168, %v234, %v233
        %v236 = vsel %vm170, %v234, %v235
        %v237 = vrot.slane %v226, 5
        %v238 = vsel %vm173, %v237, %v236
        %v239 = vsel %vm175, %v237, %v238
        %240 = vrot.lane.b32.xlu0 %v239, 16
        %v241 = vpop.permute.xlu0 %240
        %243 = vst.msk [vmem:[%s152 + $0x4] sm:$0xf] %vm200, %v241
        %v244 = vld [vmem:[%s134 + $0x1] sm:$0x1]
        %v245 = vld [vmem:[%s134 + $0x5] sm:$0x1]
        %v246 = vld [vmem:[%s134 + $0x9] sm:$0x1]
        %v247 = vld [vmem:[%s134 + $0xd] sm:$0x1]
        %v252 = vrot.slane %v245, 7
        %v253 = vsel %vm163, %v252, %v244
        %v254 = vsel %vm165, %v252, %v253
        %v255 = vrot.slane %v246, 6
        %v256 = vsel %vm168, %v255, %v254
        %v257 = vsel %vm170, %v255, %v256
        %v258 = vrot.slane %v247, 5
        %v259 = vsel %vm173, %v258, %v257
        %v260 = vsel %vm175, %v258, %v259
        %261 = vrot.lane.b32.xlu0 %v260, 16
        %v262 = vpop.permute.xlu0 %261
        %vm264 = vcmask 257152
        %265 = vst.msk [vmem:[%s152] sm:$0xf] %vm264, %v262
        %v266 = vld [vmem:[%s134 + $0x1] sm:$0x1]
        %v267 = vld [vmem:[%s134 + $0x5] sm:$0x1]
        %v268 = vld [vmem:[%s134 + $0x9] sm:$0x1]
        %v269 = vld [vmem:[%s134 + $0xd] sm:$0x1]
        %v274 = vrot.slane %v267, 7
        %v275 = vsel %vm163, %v274, %v266
        %v276 = vsel %vm165, %v274, %v275
        %v277 = vrot.slane %v268, 6
        %v278 = vsel %vm168, %v277, %v276
        %v279 = vsel %vm170, %v277, %v278
        %v280 = vrot.slane %v269, 5
        %v281 = vsel %vm173, %v280, %v279
        %v282 = vsel %vm175, %v280, %v281
        %283 = vrot.lane.b32.xlu0 %v282, 64
        %v284 = vpop.permute.xlu0 %283
        %vm286 = vcmask 781952
        %287 = vst.msk [vmem:[%s152] sm:$0xf] %vm286, %v284
        %v288 = vld [vmem:[%s134 + $0x1] sm:$0x1]
        %v289 = vld [vmem:[%s134 + $0x5] sm:$0x1]
        %v290 = vld [vmem:[%s134 + $0x9] sm:$0x1]
        %v291 = vld [vmem:[%s134 + $0xd] sm:$0x1]
        %v296 = vrot.slane %v289, 7
        %v297 = vsel %vm163, %v296, %v288
        %v298 = vsel %vm165, %v296, %v297
        %v299 = vrot.slane %v290, 6
        %v300 = vsel %vm168, %v299, %v298
        %v301 = vsel %vm170, %v299, %v300
        %v302 = vrot.slane %v291, 5
        %v303 = vsel %vm173, %v302, %v301
        %v304 = vsel %vm175, %v302, %v303
        %305 = vrot.lane.b32.xlu0 %v304, 112
        %v306 = vpop.permute.xlu0 %305
        %308 = vst.msk [vmem:[%s152 + $0x4] sm:$0xf] %vm264, %v306
        %v309 = vld [vmem:[%s134 + $0x1] sm:$0x1]
        %v310 = vld [vmem:[%s134 + $0x5] sm:$0x1]
        %v311 = vld [vmem:[%s134 + $0x9] sm:$0x1]
        %v312 = vld [vmem:[%s134 + $0xd] sm:$0x1]
        %v317 = vrot.slane %v310, 7
        %v318 = vsel %vm163, %v317, %v309
        %v319 = vsel %vm165, %v317, %v318
        %v320 = vrot.slane %v311, 6
        %v321 = vsel %vm168, %v320, %v319
        %v322 = vsel %vm170, %v320, %v321
        %v323 = vrot.slane %v312, 5
        %v324 = vsel %vm173, %v323, %v322
        %v325 = vsel %vm175, %v323, %v324
        %326 = vrot.lane.b32.xlu0 %v325, 32
        %v327 = vpop.permute.xlu0 %326
        %329 = vst.msk [vmem:[%s152 + $0x4] sm:$0xf] %vm286, %v327
        %v330 = vld [vmem:[%s134 + $0x2] sm:$0x1]
        %v331 = vld [vmem:[%s134 + $0x6] sm:$0x1]
        %v332 = vld [vmem:[%s134 + $0xa] sm:$0x1]
        %v333 = vld [vmem:[%s134 + $0xe] sm:$0x1]
        %v338 = vrot.slane %v331, 7
        %v339 = vsel %vm163, %v338, %v330
        %v340 = vsel %vm165, %v338, %v339
        %v341 = vrot.slane %v332, 6
        %v342 = vsel %vm168, %v341, %v340
        %v343 = vsel %vm170, %v341, %v342
        %v344 = vrot.slane %v333, 5
        %v345 = vsel %vm173, %v344, %v343
        %v346 = vsel %vm175, %v344, %v345
        %347 = vrot.lane.b32.xlu0 %v346, 32
        %v348 = vpop.permute.xlu0 %347
        %vm350 = vcmask 388352
        %351 = vst.msk [vmem:[%s152] sm:$0xf] %vm350, %v348
        %v352 = vld [vmem:[%s134 + $0x2] sm:$0x1]
        %v353 = vld [vmem:[%s134 + $0x6] sm:$0x1]
        %v354 = vld [vmem:[%s134 + $0xa] sm:$0x1]
        %v355 = vld [vmem:[%s134 + $0xe] sm:$0x1]
        %v360 = vrot.slane %v353, 7
        %v361 = vsel %vm163, %v360, %v352
        %v362 = vsel %vm165, %v360, %v361
        %v363 = vrot.slane %v354, 6
        %v364 = vsel %vm168, %v363, %v362
        %v365 = vsel %vm170, %v363, %v364
        %v366 = vrot.slane %v355, 5
        %v367 = vsel %vm173, %v366, %v365
        %v368 = vsel %vm175, %v366, %v367
        %369 = vrot.lane.b32.xlu0 %v368, 80
        %v370 = vpop.permute.xlu0 %369
        %vm372 = vcmask 913152
        %373 = vst.msk [vmem:[%s152] sm:$0xf] %vm372, %v370
        %v374 = vld [vmem:[%s134 + $0x2] sm:$0x1]
        %v375 = vld [vmem:[%s134 + $0x6] sm:$0x1]
        %v376 = vld [vmem:[%s134 + $0xa] sm:$0x1]
        %v377 = vld [vmem:[%s134 + $0xe] sm:$0x1]
        %v382 = vrot.slane %v375, 7
        %v383 = vsel %vm163, %v382, %v374
        %v384 = vsel %vm165, %v382, %v383
        %v385 = vrot.slane %v376, 6
        %v386 = vsel %vm168, %v385, %v384
        %v387 = vsel %vm170, %v385, %v386
        %v388 = vrot.slane %v377, 5
        %v389 = vsel %vm173, %v388, %v387
        %v390 = vsel %vm175, %v388, %v389
        %392 = vst.msk [vmem:[%s152 + $0x4] sm:$0xf] %vm350, %v390
        %v393 = vld [vmem:[%s134 + $0x2] sm:$0x1]
        %v394 = vld [vmem:[%s134 + $0x6] sm:$0x1]
        %v395 = vld [vmem:[%s134 + $0xa] sm:$0x1]
        %v396 = vld [vmem:[%s134 + $0xe] sm:$0x1]
        %v401 = vrot.slane %v394, 7
        %v402 = vsel %vm163, %v401, %v393
        %v403 = vsel %vm165, %v401, %v402
        %v404 = vrot.slane %v395, 6
        %v405 = vsel %vm168, %v404, %v403
        %v406 = vsel %vm170, %v404, %v405
        %v407 = vrot.slane %v396, 5
        %v408 = vsel %vm173, %v407, %v406
        %v409 = vsel %vm175, %v407, %v408
        %410 = vrot.lane.b32.xlu0 %v409, 48
        %v411 = vpop.permute.xlu0 %410
        %413 = vst.msk [vmem:[%s152 + $0x4] sm:$0xf] %vm372, %v411
        %v414 = vld [vmem:[%s134 + $0x3] sm:$0x1]
        %v415 = vld [vmem:[%s134 + $0x7] sm:$0x1]
        %v416 = vld [vmem:[%s134 + $0xb] sm:$0x1]
        %v417 = vld [vmem:[%s134 + $0xf] sm:$0x1]
        %v422 = vrot.slane %v415, 7
        %v423 = vsel %vm163, %v422, %v414
        %v424 = vsel %vm165, %v422, %v423
        %v425 = vrot.slane %v416, 6
        %v426 = vsel %vm168, %v425, %v424
        %v427 = vsel %vm170, %v425, %v426
        %v428 = vrot.slane %v417, 5
        %v429 = vsel %vm173, %v428, %v427
        %v430 = vsel %vm175, %v428, %v429
        %431 = vrot.lane.b32.xlu0 %v430, 48
        %v432 = vpop.permute.xlu0 %431
        %vm434 = vcmask 519552
        %435 = vst.msk [vmem:[%s152] sm:$0xf] %vm434, %v432
        %v436 = vld [vmem:[%s134 + $0x3] sm:$0x1]
        %v437 = vld [vmem:[%s134 + $0x7] sm:$0x1]
        %v438 = vld [vmem:[%s134 + $0xb] sm:$0x1]
        %v439 = vld [vmem:[%s134 + $0xf] sm:$0x1]
        %v444 = vrot.slane %v437, 7
        %v445 = vsel %vm163, %v444, %v436
        %v446 = vsel %vm165, %v444, %v445
        %v447 = vrot.slane %v438, 6
        %v448 = vsel %vm168, %v447, %v446
        %v449 = vsel %vm170, %v447, %v448
        %v450 = vrot.slane %v439, 5
        %v451 = vsel %vm173, %v450, %v449
        %v452 = vsel %vm175, %v450, %v451
        %453 = vrot.lane.b32.xlu0 %v452, 96
        %v454 = vpop.permute.xlu0 %453
        %vm456 = vcmask 1044352
        %457 = vst.msk [vmem:[%s152] sm:$0xf] %vm456, %v454
        %v458 = vld [vmem:[%s134 + $0x3] sm:$0x1]
        %v459 = vld [vmem:[%s134 + $0x7] sm:$0x1]
        %v460 = vld [vmem:[%s134 + $0xb] sm:$0x1]
        %v461 = vld [vmem:[%s134 + $0xf] sm:$0x1]
        %v466 = vrot.slane %v459, 7
        %v467 = vsel %vm163, %v466, %v458
        %v468 = vsel %vm165, %v466, %v467
        %v469 = vrot.slane %v460, 6
        %v470 = vsel %vm168, %v469, %v468
        %v471 = vsel %vm170, %v469, %v470
        %v472 = vrot.slane %v461, 5
        %v473 = vsel %vm173, %v472, %v471
        %v474 = vsel %vm175, %v472, %v473
        %475 = vrot.lane.b32.xlu0 %v474, 16
        %v476 = vpop.permute.xlu0 %475
        %478 = vst.msk [vmem:[%s152 + $0x4] sm:$0xf] %vm434, %v476
        %v479 = vld [vmem:[%s134 + $0x3] sm:$0x1]
        %v480 = vld [vmem:[%s134 + $0x7] sm:$0x1]
        %v481 = vld [vmem:[%s134 + $0xb] sm:$0x1]
        %v482 = vld [vmem:[%s134 + $0xf] sm:$0x1]
        %v487 = vrot.slane %v480, 7
        %v488 = vsel %vm163, %v487, %v479
        %v489 = vsel %vm165, %v487, %v488
        %v490 = vrot.slane %v481, 6
        %v491 = vsel %vm168, %v490, %v489
        %v492 = vsel %vm170, %v490, %v491
        %v493 = vrot.slane %v482, 5
        %v494 = vsel %vm173, %v493, %v492
        %v495 = vsel %vm175, %v493, %v494
        %496 = vrot.lane.b32.xlu0 %v495, 64
        %v497 = vpop.permute.xlu0 %496
        %499 = vst.msk [vmem:[%s152 + $0x4] sm:$0xf] %vm456, %v497
        %s500 = sand.u32 %s68, 1
        %s501 = scalar_lea.sflag [#allocation4], %s500
        %s502 = sand.u32 %s68, 1
        %s503 = smul.addr %s502, 8
        %s504 = scalar_lea.vmem [#allocation5], %s503
        // Predicated region
        $region29: #{tpu_custom_call.1} parent=23 // pred_check
          %p505 = pneg %p78
        $region30: #{tpu_custom_call.1} parent=23 // pred_check_branch
          %507 = sbr.rel (%p505) target = $region32
        $region31: #{tpu_custom_call.1} parent=23 // pred_region
          %s509 = ssub.s32 128, 128
          %510 = vsyncadd %s501, %s509
          %s511 = smul.addr %s23, 2
          %s512 = smul.addr %s22, 2
          %s513 = sadd.s32 %s511, %s512
          %s514 = smul.addr %s513, 64
          %s515 = scalar_lea.hbm %s1, %s514
          %s517 = sshll.u32 %s504, 4
          %s518 = int_to_ptr.vmem [resolvable:$true] %s517
          %520 = dma.vmem_to_hbm [thread:$0]  %s518, 128, %s515, %s501
        $region32: #{tpu_custom_call.1} parent=23 // pred_fallthru
          _
      $region24: #{tpu_custom_call.1} parent=5 // pred_fallthru
        _
      %p521 = scmp.le.s32.totalorder 2, %s13
      // Predicated region
      $region33: #{tpu_custom_call.1} parent=5 // pred_check
        %p522 = pneg %p521
      $region34: #{tpu_custom_call.1} parent=5 // pred_check_branch
        %524 = sbr.rel (%p522) target = $region36
      $region35: #{tpu_custom_call.1} parent=5 // pred_region
        %s525 = ssub.s32 %s13, 2
        // Predicated region
        $region37: #{tpu_custom_call.1} parent=35 // pred_check
          %p526 = pneg %p84
        $region38: #{tpu_custom_call.1} parent=35 // pred_check_branch
          %528 = sbr.rel (%p526) target = $region40
        $region39: #{tpu_custom_call.1} parent=35 // pred_region
          %s529 = sand.u32 %s69, 1
          %s530 = scalar_lea.sflag [#allocation4], %s529
          %s531 = sand.u32 %s69, 1
          %s532 = smul.addr %s531, 8
          %s533 = scalar_lea.vmem [#allocation5], %s532
          %534 = dma.done %s530, 128
        $region40: #{tpu_custom_call.1} parent=35 // pred_fallthru
          _
      $region36: #{tpu_custom_call.1} parent=5 // pred_fallthru
        _
    $region6: #{tpu_custom_call.1} parent=1 // loop_footer
      %s17 = sadd.s32 1, %s13
    $region7: #{tpu_custom_call.1} parent=1 // loop_footer_branch
      %12 = sbr.rel target = $region3
    $region8: #{tpu_custom_call.1} parent=1 // loop_exit
      _
    %535 = vsyncpa [#allocation3], 1
    %s536 = scalar_lea.sflag [#allocation3], 1
    %537 = vsyncpa %s536, 1
    %538 = vsyncpa [#allocation4], 1
    %s539 = scalar_lea.sflag [#allocation4], 1
    %540 = vsyncpa %s539, 1

</llo_original>
